<compile_context>
chip_gen: v6e
topology: v6e:2x2x1
jax: 0.10.0
libtpu: 0.0.40
codegen_flags: <defaults>
</compile_context>

<pallas_src>
import functools

import jax
import jax.numpy as jnp
import numpy as np
from jax.experimental import pallas as pl
from jax.experimental.pallas import tpu as pltpu


DEFAULT_MASK_VALUE = -0.7 * float(np.finfo(np.float32).max)


def _fit_block(dim, target, align=1):
    """Largest divisor of `dim` that is <= target and a multiple of `align`.

    Falls back to the full extent (always a legal block) if no aligned divisor
    exists; avoids the old behavior of jumping straight to the full extent
    whenever `target` does not divide `dim`.
    """
    upper = min(dim, target)
    for cand in range(upper, 0, -1):
        if dim % cand == 0 and cand % align == 0:
            return cand
    return dim


# ---------------------------------------------------------------------------
# Tiled linear projection:  y = x @ w.T   with x:(M,K), w:(N,K)  (nn.Linear)
# ---------------------------------------------------------------------------
def _linear_kernel(x_ref, w_ref, o_ref, acc_ref):
    @pl.when(pl.program_id(2) == 0)
    def _():
        acc_ref[...] = jnp.zeros_like(acc_ref)

    # Contract the last axes of both operands: the MXU consumes the transposed
    # RHS natively, no explicit `.T` (would be an XLU vxpose of the whole tile).
    acc_ref[...] += jax.lax.dot_general(
        x_ref[...],
        w_ref[...],
        dimension_numbers=(((1,), (1,)), ((), ())),
        preferred_element_type=jnp.float32,
    )

    @pl.when(pl.program_id(2) == pl.num_programs(2) - 1)
    def _():
        o_ref[...] = acc_ref[...].astype(o_ref.dtype)


def linear(x, w, *, tm=1024, tn=512, tk=1024):
    """y = x @ w.T, tiled for the MXU. Bigger tiles halve weight/activation
    re-streaming; f32 worst case ~18 MiB of VMEM (safe on v5e/v6e/v7x with the
    raised 32 MiB scoped limit)."""
    M, K = x.shape
    N, K2 = w.shape
    assert K == K2
    bm = _fit_block(M, tm, 8)     # sublane dim of x / out
    bn = _fit_block(N, tn, 128)   # lane dim of out
    bk = _fit_block(K, tk, 128)   # lane dim of x / w
    grid = (M // bm, N // bn, K // bk)
    return pl.pallas_call(
        _linear_kernel,
        out_shape=jax.ShapeDtypeStruct((M, N), x.dtype),
        grid_spec=pltpu.PrefetchScalarGridSpec(
            num_scalar_prefetch=0,
            grid=grid,
            in_specs=[
                pl.BlockSpec((bm, bk), lambda i, j, k: (i, k)),
                pl.BlockSpec((bn, bk), lambda i, j, k: (j, k)),
            ],
            out_specs=pl.BlockSpec((bm, bn), lambda i, j, k: (i, j)),
            scratch_shapes=[pltpu.VMEM((bm, bn), jnp.float32)],
        ),
        compiler_params=pltpu.CompilerParams(
            dimension_semantics=("parallel", "parallel", "arbitrary"),
            vmem_limit_bytes=32 * 1024 * 1024,
        ),
    )(x, w)


# ---------------------------------------------------------------------------
# Flash-style attention core: GQA-packed heads, band-restricted KV iteration,
# in-kernel causal + sliding-window mask only on edge tiles.
# ---------------------------------------------------------------------------
def _flash_attn_kernel(q_ref, k_ref, v_ref, o_ref, m_ref, l_ref, acc_ref, *,
                       scale, tq, tk, window, repeats):
    qi = pl.program_id(2)
    j = pl.program_id(3)
    q_start = qi * tq

    # Same arithmetic as the kv index_map (so k_ref/v_ref hold block kv_lo+j
    # whenever this step is valid).
    kv_lo = jnp.maximum(0, (q_start - window + 1) // tk)
    kv_hi = (q_start + tq - 1) // tk
    kb = kv_lo + j
    k_start = kb * tk
    valid = kb <= kv_hi            # redundant clamped edge steps are skipped

    @pl.when(j == 0)
    def _():
        m_ref[...] = jnp.full_like(m_ref, DEFAULT_MASK_VALUE)
        l_ref[...] = jnp.zeros_like(l_ref)
        acc_ref[...] = jnp.zeros_like(acc_ref)

    # Tile fully inside the band (strictly below the diagonal AND fully inside
    # the sliding window) needs no mask work at all.
    interior = jnp.logical_and(
        k_start + (tk - 1) <= q_start,
        k_start + window > q_start + (tq - 1),
    )

    def tile_update(masked):
        k = k_ref[0, 0]                               # (tk, D)
        v = v_ref[0, 0]                               # (tk, D)
        if masked:
            # Mask generated once per tile and shared by all packed heads.
            row = q_start + jax.lax.broadcasted_iota(jnp.int32, (tq, tk), 0)
            col = k_start + jax.lax.broadcasted_iota(jnp.int32, (tq, tk), 1)
            keep = jnp.logical_and(col <= row, col > row - window)
        for h in range(repeats):                      # static unroll over GQA group
            # Fold the softmax scale into q: O(tq*D) instead of O(tq*tk).
            q = q_ref[0, h] * scale                   # (tq, D), input dtype
            s = jax.lax.dot_general(
                q, k, (((1,), (1,)), ((), ())), preferred_element_type=jnp.float32
            )                                         # (tq, tk) f32
            if masked:
                s = jnp.where(keep, s, DEFAULT_MASK_VALUE)
            m_prev = m_ref[h]                         # (tq, 1)
            m_next = jnp.maximum(m_prev, jnp.max(s, axis=-1, keepdims=True))
            alpha = jnp.exp(m_prev - m_next)
            p = jnp.exp(s - m_next)
            if masked:
                p = jnp.where(keep, p, 0.0)           # no reliance on underflow
            l_ref[h] = alpha * l_ref[h] + jnp.sum(p, axis=-1, keepdims=True)
            acc_ref[h] = alpha * acc_ref[h] + jax.lax.dot_general(
                p.astype(v.dtype), v, (((1,), (0,)), ((), ())),
                preferred_element_type=jnp.float32,
            )
            m_ref[h] = m_next

    @pl.when(jnp.logical_and(valid, interior))
    def _():
        tile_update(masked=False)

    @pl.when(jnp.logical_and(valid, jnp.logical_not(interior)))
    def _():
        tile_update(masked=True)

    @pl.when(j == pl.num_programs(3) - 1)
    def _():
        for h in range(repeats):
            inv_l = pl.reciprocal(l_ref[h], approx=True)   # EUP slot, not VALU
            o_ref[0, h] = (acc_ref[h] * inv_l).astype(o_ref.dtype)


def attention_core(q, k, v, *, scale, window, tq_target=512, tk_target=256):
    """q:(B,H,S,D); k,v:(B,Hkv,S,D) -> (B,H,S,D).

    GQA: all `repeats` query heads of one KV group are packed into the q/out
    block, so each K/V tile is fetched once per group.  The KV grid axis only
    spans tiles intersecting the causal/sliding-window band of the q tile.
    """
    B, H, S, D = q.shape
    _, Hkv, Sk, Dk = k.shape
    assert Sk == S and Dk == D and H % Hkv == 0
    repeats = H // Hkv

    tq = _fit_block(S, tq_target, 8)
    tk = _fit_block(S, tk_target, 8)
    nq = S // tq
    nk_total = S // tk
    # Upper bound on KV tiles intersecting the band of any q tile.
    nkv = min(nk_total, (tq + window - 2) // tk + 2)

    def q_map(b, g, qi, j):
        return (b, g, qi, 0)

    def kv_map(b, g, qi, j):
        q_start = qi * tq
        lo = jnp.maximum(0, (q_start - window + 1) // tk)
        return (b, g, jnp.minimum(lo + j, nk_total - 1), 0)

    kern = functools.partial(_flash_attn_kernel, scale=scale, tq=tq, tk=tk,
                             window=window, repeats=repeats)
    return pl.pallas_call(
        kern,
        out_shape=jax.ShapeDtypeStruct((B, H, S, D), q.dtype),
        grid_spec=pltpu.PrefetchScalarGridSpec(
            num_scalar_prefetch=0,
            grid=(B, Hkv, nq, nkv),
            in_specs=[
                pl.BlockSpec((1, repeats, tq, D), q_map),
                pl.BlockSpec((1, 1, tk, D), kv_map),
                pl.BlockSpec((1, 1, tk, D), kv_map),
            ],
            out_specs=pl.BlockSpec((1, repeats, tq, D), q_map),
            scratch_shapes=[
                pltpu.VMEM((repeats, tq, 1), jnp.float32),   # running max
                pltpu.VMEM((repeats, tq, 1), jnp.float32),   # running denom
                pltpu.VMEM((repeats, tq, D), jnp.float32),   # output accumulator
            ],
        ),
        compiler_params=pltpu.CompilerParams(
            dimension_semantics=("parallel", "parallel", "parallel", "arbitrary"),
        ),
    )(q, k, v)


# ---------------------------------------------------------------------------
# Plain-JAX glue (rotary embedding, cache scatter, reshapes)
# ---------------------------------------------------------------------------
def apply_rotary_emb(xq, xk, cos, sin):
    """xq:(B,S,H,D) xk:(B,S,Hkv,D); cos/sin:(S, D//2). Interleaved (real, imag)."""

    def rot(x):
        xf = x.astype(jnp.float32)
        xr = xf[..., 0::2]
        xi = xf[..., 1::2]
        c = cos[None, :, None, :]
        s = sin[None, :, None, :]
        out_r = xr * c - xi * s
        out_i = xr * s + xi * c
        return jnp.stack([out_r, out_i], axis=-1).reshape(x.shape).astype(x.dtype)

    return rot(xq), rot(xk)


def attention_forward(params, x, cos, sin, positions, cache_k, cache_v, args):
    bsz, seqlen, dim = x.shape
    n_heads = args["n_heads"]
    n_kv_heads = args["n_kv_heads"]
    head_dim = args["head_dim"]
    window = args["sliding_window"]
    scale = head_dim ** (-0.5)

    q_dim = n_heads * head_dim
    kv_dim = n_kv_heads * head_dim

    # Fused QKV projection; the fused weight is prebuilt once at init (no
    # per-call HBM concat) and x is read from HBM once for all three projections.
    x2 = x.reshape(bsz * seqlen, dim)
    qkv = linear(x2, params["wqkv"])
    xq = qkv[:, :q_dim].reshape(bsz, seqlen, n_heads, head_dim)
    xk = qkv[:, q_dim:q_dim + kv_dim].reshape(bsz, seqlen, n_kv_heads, head_dim)
    xv = qkv[:, q_dim + kv_dim:].reshape(bsz, seqlen, n_kv_heads, head_dim)

    xq, xk = apply_rotary_emb(xq, xk, cos, sin)

    # KV-cache scatter (side effect of the PyTorch module; contiguous prefill).
    scatter_pos = positions[-window:] % window
    new_cache_k = cache_k.at[:bsz, scatter_pos].set(
        xk[:, -window:].astype(cache_k.dtype))
    new_cache_v = cache_v.at[:bsz, scatter_pos].set(
        xv[:, -window:].astype(cache_v.dtype))

    # Prefill branch (positions.shape[0] > 1): attend over current xk/xv with a
    # causal + sliding-window mask generated inside the kernel.
    q = jnp.transpose(xq, (0, 2, 1, 3))   # (B, H, S, D)
    k = jnp.transpose(xk, (0, 2, 1, 3))   # (B, Hkv, S, D)
    v = jnp.transpose(xv, (0, 2, 1, 3))
    out = attention_core(q, k, v, scale=scale, window=window)
    out = jnp.transpose(out, (0, 2, 1, 3)).reshape(bsz * seqlen, q_dim)
    y = linear(out, params["wo"]).reshape(bsz, seqlen, dim)
    return y, new_cache_k, new_cache_v


# ---------------------------------------------------------------------------
# Pure-JAX reference (mirrors the PyTorch forward, prefill branch)
# ---------------------------------------------------------------------------
def reference_forward(params, x, cos, sin, mask, args):
    bsz, seqlen, dim = x.shape
    n_heads, n_kv, hd = args["n_heads"], args["n_kv_heads"], args["head_dim"]
    repeats = n_heads // n_kv
    scale = hd ** (-0.5)

    xf = x.astype(jnp.float32)
    wq = params["wq"].astype(jnp.float32)
    wk = params["wk"].astype(jnp.float32)
    wv = params["wv"].astype(jnp.float32)
    wo = params["wo"].astype(jnp.float32)

    xq = (xf @ wq.T).reshape(bsz, seqlen, n_heads, hd)
    xk = (xf @ wk.T).reshape(bsz, seqlen, n_kv, hd)
    xv = (xf @ wv.T).reshape(bsz, seqlen, n_kv, hd)
    xq, xk = apply_rotary_emb(xq, xk, cos, sin)

    key = jnp.repeat(xk, repeats, axis=2)
    value = jnp.repeat(xv, repeats, axis=2)
    q = jnp.transpose(xq, (0, 2, 1, 3))
    k = jnp.transpose(key, (0, 2, 1, 3))
    v = jnp.transpose(value, (0, 2, 1, 3))
    scores = jnp.einsum("bhqd,bhkd->bhqk", q, k) * scale + mask[None, None]
    probs = jax.nn.softmax(scores.astype(jnp.float32), axis=-1)
    out = jnp.einsum("bhqk,bhkd->bhqd", probs, v)
    out = jnp.transpose(out, (0, 2, 1, 3)).reshape(bsz, seqlen, -1)
    return out @ wo.T


def make_band_mask(seqlen, window):
    row = jnp.arange(seqlen)[:, None]
    col = jnp.arange(seqlen)[None, :]
    keep = (col <= row) & (col > row - window)
    return jnp.where(keep, 0.0, -1e30).astype(jnp.float32)


# ---------------------------------------------------------------------------
if __name__ == "__main__":
    args = dict(
        dim=32,
        n_heads=4,
        n_kv_heads=2,
        head_dim=8,
        sliding_window=8,
        max_batch_size=2,
    )
    bsz, seqlen = 2, 8
    dim, n_heads, n_kv, hd = (args["dim"], args["n_heads"], args["n_kv_heads"],
                              args["head_dim"])

    key = jax.random.PRNGKey(0)
    kx, kq, kk, kv, ko = jax.random.split(key, 5)
    x = jax.random.normal(kx, (bsz, seqlen, dim), dtype=jnp.float32)
    params = {
        "wq": jax.random.normal(kq, (n_heads * hd, dim), dtype=jnp.float32) * 0.05,
        "wk": jax.random.normal(kk, (n_kv * hd, dim), dtype=jnp.float32) * 0.05,
        "wv": jax.random.normal(kv, (n_kv * hd, dim), dtype=jnp.float32) * 0.05,
        "wo": jax.random.normal(ko, (dim, n_heads * hd), dtype=jnp.float32) * 0.05,
    }
    # Fused QKV weight built once at "module init" (not per forward call).
    params["wqkv"] = jnp.concatenate(
        [params["wq"], params["wk"], params["wv"]], axis=0)

    # freqs_cis (complex in PyTorch) as cos/sin of shape (S, head_dim//2).
    positions = jnp.arange(seqlen, dtype=jnp.int32)
    inv_freq = 1.0 / (10000.0 ** (jnp.arange(0, hd, 2, dtype=jnp.float32) / hd))
    angles = positions.astype(jnp.float32)[:, None] * inv_freq[None, :]
    cos, sin = jnp.cos(angles), jnp.sin(angles)

    cache_k = jnp.zeros(
        (args["max_batch_size"], args["sliding_window"], n_kv, hd), dtype=jnp.float16)
    cache_v = jnp.zeros_like(cache_k)

    # --- f32 run (tight correctness check against the pure-JAX reference) ---
    out, new_ck, new_cv = attention_forward(
        params, x, cos, sin, positions, cache_k, cache_v, args)
    out = jax.block_until_ready(out)
    jax.block_until_ready((new_ck, new_cv))

    mask = make_band_mask(seqlen, args["sliding_window"])
    ref = reference_forward(params, x, cos, sin, mask, args)
    np.testing.assert_allclose(np.asarray(out), np.asarray(ref), rtol=5e-3, atol=5e-3)
    assert out.shape == (bsz, seqlen, dim) and out.dtype == jnp.float32

    # --- bf16 run: kernels are dtype-preserving, so MXU operands stay bf16 ---
    x_bf = x.astype(jnp.bfloat16)
    params_bf = {k_: v_.astype(jnp.bfloat16) for k_, v_ in params.items()}
    out_bf, _, _ = attention_forward(
        params_bf, x_bf, cos, sin, positions, cache_k, cache_v, args)
    out_bf = jax.block_until_ready(out_bf)
    np.testing.assert_allclose(
        np.asarray(out_bf.astype(jnp.float32)), np.asarray(ref), rtol=1e-1, atol=1e-1)

    print("KERNEL_OK")
</pallas_src>

<mosaic_0001>
module attributes {stable_mosaic.version = 11 : i64} {
  func.func @_linear_kernel(%arg0: i32, %arg1: i32, %arg2: i32, %arg3: memref<16x32xf32, #tpu.memory_space<vmem>>, %arg4: memref<64x32xf32, #tpu.memory_space<vmem>>, %arg5: memref<16x64xf32, #tpu.memory_space<vmem>>, %arg6: memref<16x64xf32, #tpu.memory_space<vmem>>) attributes {dimension_semantics = [#tpu.dimension_semantics<parallel>, #tpu.dimension_semantics<parallel>, #tpu.dimension_semantics<arbitrary>], iteration_bounds = array<i64: 1, 1, 1>, scalar_prefetch = 0 : i64, scratch_operands = 1 : i64, tpu.core_type = #tpu.core_type<tc>, window_params = [{transform_indices = @transform_0, window_bounds = array<i64: 16, 32>}, {transform_indices = @transform_1, window_bounds = array<i64: 64, 32>}, {transform_indices = @transform_2, window_bounds = array<i64: 16, 64>}]} {
    %c0_i32 = arith.constant 0 : i32
    %0 = arith.cmpi eq, %arg2, %c0_i32 : i32
    %1 = arith.extui %0 : i1 to i32
    %c0_i32_0 = arith.constant 0 : i32
    %2 = arith.cmpi ne, %1, %c0_i32_0 : i32
    scf.if %2 {
      %cst_10 = arith.constant 0.000000e+00 : f32
      %12 = vector.broadcast %cst_10 : f32 to vector<16x64xf32>
      %c0_11 = arith.constant 0 : index
      %c0_12 = arith.constant 0 : index
      %13 = vector.load %arg6[%c0_11, %c0_12] : memref<16x64xf32, #tpu.memory_space<vmem>>, vector<16x64xf32>
      tpu.vector_store %arg6[%c0_11, %c0_12], %12 {strides = array<i32>} : memref<16x64xf32, #tpu.memory_space<vmem>>, vector<16x64xf32>,
    } else {
    }
    %c0 = arith.constant 0 : index
    %c0_1 = arith.constant 0 : index
    %3 = vector.load %arg6[%c0, %c0_1] : memref<16x64xf32, #tpu.memory_space<vmem>>, vector<16x64xf32>
    %c0_2 = arith.constant 0 : index
    %c0_3 = arith.constant 0 : index
    %4 = vector.load %arg3[%c0_2, %c0_3] : memref<16x32xf32, #tpu.memory_space<vmem>>, vector<16x32xf32>
    %c0_4 = arith.constant 0 : index
    %c0_5 = arith.constant 0 : index
    %5 = vector.load %arg4[%c0_4, %c0_5] : memref<64x32xf32, #tpu.memory_space<vmem>>, vector<64x32xf32>
    %cst = arith.constant dense<0.000000e+00> : vector<16x64xf32>
    %6 = tpu.matmul %4, %5, %cst {dimension_numbers = #tpu.dot_dimension_numbers<[1], [1], [0], [0], [0, 0, 1, 0], [], []>} : vector<16x32xf32>, vector<64x32xf32>, vector<16x64xf32> -> vector<16x64xf32>
    %7 = arith.addf %3, %6 : vector<16x64xf32>
    %c0_6 = arith.constant 0 : index
    %c0_7 = arith.constant 0 : index
    %8 = vector.load %arg6[%c0_6, %c0_7] : memref<16x64xf32, #tpu.memory_space<vmem>>, vector<16x64xf32>
    tpu.vector_store %arg6[%c0_6, %c0_7], %7 {strides = array<i32>} : memref<16x64xf32, #tpu.memory_space<vmem>>, vector<16x64xf32>,
    %c0_i32_8 = arith.constant 0 : i32
    %9 = arith.cmpi eq, %arg2, %c0_i32_8 : i32
    %10 = arith.extui %9 : i1 to i32
    %c0_i32_9 = arith.constant 0 : i32
    %11 = arith.cmpi ne, %10, %c0_i32_9 : i32
    scf.if %11 {
      %c0_10 = arith.constant 0 : index
      %c0_11 = arith.constant 0 : index
      %12 = vector.load %arg6[%c0_10, %c0_11] : memref<16x64xf32, #tpu.memory_space<vmem>>, vector<16x64xf32>
      %c0_12 = arith.constant 0 : index
      %c0_13 = arith.constant 0 : index
      %13 = vector.load %arg5[%c0_12, %c0_13] : memref<16x64xf32, #tpu.memory_space<vmem>>, vector<16x64xf32>
      tpu.vector_store %arg5[%c0_12, %c0_13], %12 {strides = array<i32>} : memref<16x64xf32, #tpu.memory_space<vmem>>, vector<16x64xf32>,
    } else {
    }
    return
  }
  func.func @transform_0(%arg0: i32, %arg1: i32, %arg2: i32) -> (i32, i32) {
    %c0_i32 = arith.constant 0 : i32
    return %arg0, %arg2 : i32, i32
  }
  func.func @transform_1(%arg0: i32, %arg1: i32, %arg2: i32) -> (i32, i32) {
    %c0_i32 = arith.constant 0 : i32
    return %arg1, %arg2 : i32, i32
  }
  func.func @transform_2(%arg0: i32, %arg1: i32, %arg2: i32) -> (i32, i32) {
    %c0_i32 = arith.constant 0 : i32
    return %arg0, %arg1 : i32, i32
  }
}

</mosaic_0001>

<llo_original>
// kernel: tpu_custom_call.1
$region0: #{tpu_custom_call.1}
  #allocation0 [shape = 'u32[]', space=smem, size = 0x4, offset = 0x4, fixed_abs, tag = 'smem constant byte address 0x4 - core index']
  #allocation1 [shape = 'u32[144,128]{1,0:T(1,128)}', space=vmem, size = 0x12000, scoped, tag = 'internal scratch']
  #allocation2 [shape = 'f32[16,64]{1,0:T(8,128)}', space=vmem, size = 0x2000, scoped, tag = 'scratch operand']
  %s0 = inlined_call_operand.vmem [shape: f32[16,32], index: 0, kind: input, shape index: {}]
  %s1 = inlined_call_operand.vmem [shape: f32[64,32], index: 1, kind: input, shape index: {}]
  %s2 = inlined_call_operand.hbm [shape: f32[16,64], index: 2, kind: output, shape index: {}]
  %s3 = sld [smem:[#allocation0]]
  $region26: #{tpu_custom_call.1} parent=0
    _
  %s5 = ssub.s32 1, %s3
  %s6 = scalar_select 0, %s5, %s3
  $region1: #{tpu_custom_call.1} parent=0
    #allocation3 [shape = 'u8[8192]{0}', space=vmem, size = 0x2000, scoped, tag = 'output window, operand 0, single buffered']
    #allocation4 [shape = 's32[1]{0}', space=sflag, size = 0x4, scoped, tag = 'scoped memory for tpu_custom_call.1']
    %7 = vsyncpa [#allocation4], 0
    // Predicated region
    $region2: #{tpu_custom_call.1} parent=1 // pred_check
      _
    $region3: #{tpu_custom_call.1} parent=1 // pred_check_branch
      %9 = sbr.rel (0) target = $region5
    $region4: #{tpu_custom_call.1} parent=1 // pred_region
      _
    $region5: #{tpu_custom_call.1} parent=1 // pred_fallthru
      _
    // Predicated region
    $region6: #{tpu_custom_call.1} parent=1 // pred_check
      _
    $region7: #{tpu_custom_call.1} parent=1 // pred_check_branch
      %11 = sbr.rel (0) target = $region9
    $region8: #{tpu_custom_call.1} parent=1 // pred_region
      _
    $region9: #{tpu_custom_call.1} parent=1 // pred_fallthru
      _
    %p12 = scmp.eq.s32.totalorder 0, 0
    // Predicated region
    $region10: #{tpu_custom_call.1} parent=1 // pred_check
      %p13 = pneg %p12
    $region11: #{tpu_custom_call.1} parent=1 // pred_check_branch
      %15 = sbr.rel (%p13) target = $region13
    $region12: #{tpu_custom_call.1} parent=1 // pred_region
      %vm16 = vcmask 523264
      %17 = vst.msk [vmem:[#allocation2] sm:$0xff] %vm16, 0.0
      %18 = vst.msk [vmem:[#allocation2 + $0x8] sm:$0xff] %vm16, 0.0
    $region13: #{tpu_custom_call.1} parent=1 // pred_fallthru
      _
    %v19 = vld [vmem:[#allocation2] sm:$0xff]
    %v20 = vld [vmem:[#allocation2 + $0x8] sm:$0xff]
    %v21 = vld [vmem:[%s0] sm:$0xff]
    %v22 = vld [vmem:[%s0 + $0x8] sm:$0xff]
    %v23 = vld [vmem:[%s1] sm:$0xff]
    %v24 = vld [vmem:[%s1 + $0x8] sm:$0xff]
    %v25 = vld [vmem:[%s1 + $0x10] sm:$0xff]
    %v26 = vld [vmem:[%s1 + $0x18] sm:$0xff]
    %v27 = vld [vmem:[%s1 + $0x20] sm:$0xff]
    %v28 = vld [vmem:[%s1 + $0x28] sm:$0xff]
    %v29 = vld [vmem:[%s1 + $0x30] sm:$0xff]
    %v30 = vld [vmem:[%s1 + $0x38] sm:$0xff]
    %vm31 = vcmask 261120
    %v33 = vsel %vm31, %v21, 0
    %v36 = vsel %vm31, %v22, 0
    %v39 = vsel %vm31, %v23, 0
    %v42 = vsel %vm31, %v24, 0
    %v45 = vsel %vm31, %v25, 0
    %v48 = vsel %vm31, %v26, 0
    %v51 = vsel %vm31, %v27, 0
    %v54 = vsel %vm31, %v28, 0
    %v57 = vsel %vm31, %v29, 0
    %v60 = vsel %vm31, %v30, 0
    %62 = vmatprep.subr.mxu0 0.0
    %63 = vmatpush1.xpose.msra.mxu0 0.0
    %64 = vmatprep.subr.mxu0 0.0
    %65 = vmatpush1.xpose.msra.mxu0 0.0
    %66 = vmatprep.subr.mxu0 0.0
    %67 = vmatpush1.xpose.msra.mxu0 0.0
    %68 = vmatprep.subr.mxu0 0.0
    %69 = vmatpush1.xpose.msra.mxu0 0.0
    %70 = vmatprep.subr.mxu0 0.0
    %71 = vmatpush1.xpose.msra.mxu0 0.0
    %72 = vmatprep.subr.mxu0 0.0
    %73 = vmatpush1.xpose.msra.mxu0 0.0
    %74 = vmatprep.subr.mxu0 0.0
    %75 = vmatpush1.xpose.msra.mxu0 0.0
    %76 = vmatprep.subr.mxu0 0.0
    %77 = vmatpush1.xpose.msra.mxu0 0.0
    %78 = vmatprep.subr.mxu0 0.0
    %79 = vmatpush1.xpose.msra.mxu0 %v60
    %80 = vmatprep.subr.mxu0 0.0
    %81 = vmatpush1.xpose.msra.mxu0 %v57
    %82 = vmatprep.subr.mxu0 0.0
    %83 = vmatpush1.xpose.msra.mxu0 %v54
    %84 = vmatprep.subr.mxu0 0.0
    %85 = vmatpush1.xpose.msra.mxu0 %v51
    %86 = vmatprep.subr.mxu0 0.0
    %87 = vmatpush1.xpose.msra.mxu0 %v48
    %88 = vmatprep.subr.mxu0 0.0
    %89 = vmatpush1.xpose.msra.mxu0 %v45
    %90 = vmatprep.subr.mxu0 0.0
    %91 = vmatpush1.xpose.msra.mxu0 %v42
    %92 = vmatprep.subr.mxu0 0.0
    %93 = vmatpush1.xpose.msra.mxu0 %v39
    %94 = vmatprep.subr.mxu0 0.0
    %95 = vmatpush2.xpose.msra.mxu0 0.0
    %96 = vmatprep.subr.mxu0 0.0
    %97 = vmatpush2.xpose.msra.mxu0 0.0
    %98 = vmatprep.subr.mxu0 0.0
    %99 = vmatpush2.xpose.msra.mxu0 0.0
    %100 = vmatprep.subr.mxu0 0.0
    %101 = vmatpush2.xpose.msra.mxu0 0.0
    %102 = vmatprep.subr.mxu0 0.0
    %103 = vmatpush2.xpose.msra.mxu0 0.0
    %104 = vmatprep.subr.mxu0 0.0
    %105 = vmatpush2.xpose.msra.mxu0 0.0
    %106 = vmatprep.subr.mxu0 0.0
    %107 = vmatpush2.xpose.msra.mxu0 0.0
    %108 = vmatprep.subr.mxu0 0.0
    %109 = vmatpush2.xpose.msra.mxu0 0.0
    %110 = vmatprep.subr.mxu0 0.0
    %111 = vmatpush2.xpose.msra.mxu0 0.0
    %112 = vmatprep.subr.mxu0 0.0
    %113 = vmatpush2.xpose.msra.mxu0 0.0
    %114 = vmatprep.subr.mxu0 0.0
    %115 = vmatpush2.xpose.msra.mxu0 0.0
    %116 = vmatprep.subr.mxu0 0.0
    %117 = vmatpush2.xpose.msra.mxu0 0.0
    %118 = vmatprep.subr.mxu0 0.0
    %119 = vmatpush2.xpose.msra.mxu0 0.0
    %120 = vmatprep.subr.mxu0 0.0
    %121 = vmatpush2.xpose.msra.mxu0 0.0
    %122 = vmatprep.subr.mxu0 0.0
    %123 = vmatpush2.xpose.msra.mxu0 0.0
    %124 = vmatprep.subr.mxu0 0.0
    %125 = vmatpush2.xpose.msra.mxu0 0.0
    %126 = vmatprep.mubr.f32.mxu0 0.0
    %127 = vmatmul.mubr.f32.gmra.mxu0 %v33
    %v128 = vpop.f32.mrf.mxu0
    %v129 = vadd.f32 0.0, %v128
    %v130 = vpop.f32.mrf.mxu0
    %131 = vmatprep.mubr.f32.mxu0 0.0
    %132 = vmatmul.mubr.f32.gmra.mxu0 %v36
    %v133 = vpop.f32.mrf.mxu0
    %v134 = vadd.f32 0.0, %v133
    %v135 = vpop.f32.mrf.mxu0
    %136 = vdwg.mxu0
    %v137 = vadd.f32 %v19, %v129
    %v138 = vadd.f32 %v20, %v134
    %vm139 = vcmask 523264
    %140 = vst.msk [vmem:[#allocation2] sm:$0xff] %vm139, %v137
    %141 = vst.msk [vmem:[#allocation2 + $0x8] sm:$0xff] %vm139, %v138
    // Predicated region
    $region14: #{tpu_custom_call.1} parent=1 // pred_check
      %p142 = pneg %p12
    $region15: #{tpu_custom_call.1} parent=1 // pred_check_branch
      %144 = sbr.rel (%p142) target = $region17
    $region16: #{tpu_custom_call.1} parent=1 // pred_region
      %v145 = vld [vmem:[#allocation2] sm:$0xff]
      %v146 = vld [vmem:[#allocation2 + $0x8] sm:$0xff]
      %147 = vst.msk [vmem:[#allocation3] sm:$0xff] %vm139, %v145
      %148 = vst.msk [vmem:[#allocation3 + $0x8] sm:$0xff] %vm139, %v146
    $region17: #{tpu_custom_call.1} parent=1 // pred_fallthru
      _
    // Predicated region
    $region18: #{tpu_custom_call.1} parent=1 // pred_check
      _
    $region19: #{tpu_custom_call.1} parent=1 // pred_check_branch
      %150 = sbr.rel (0) target = $region21
    $region20: #{tpu_custom_call.1} parent=1 // pred_region
      %s152 = ssub.s32 256, 256
      %153 = vsyncadd [#allocation4], %s152
      %s154 = sshll.u32 [#allocation3], 4
      %s155 = int_to_ptr.vmem [resolvable:$true] %s154
      %160 = dma.vmem_to_hbm [thread:$0]  %s155, 256, %s2, [#allocation4], 128, 128, 8
    $region21: #{tpu_custom_call.1} parent=1 // pred_fallthru
      _
    // Predicated region
    $region22: #{tpu_custom_call.1} parent=1 // pred_check
      _
    $region23: #{tpu_custom_call.1} parent=1 // pred_check_branch
      %162 = sbr.rel (0) target = $region25
    $region24: #{tpu_custom_call.1} parent=1 // pred_region
      %163 = dma.done [#allocation4], 256
    $region25: #{tpu_custom_call.1} parent=1 // pred_fallthru
      _
    %164 = vsyncpa [#allocation4], 1

</llo_original>
